<compile_context>
chip_gen: v6e
topology: v6e:2x2x1
jax: 0.10.0
libtpu: 0.0.40
codegen_flags: <defaults>
</compile_context>

<pallas_src>
import numpy as np
import jax
import jax.numpy as jnp
from jax.experimental import pallas as pl
from jax.experimental.pallas import tpu as pltpu


# ----------------------------------------------------------------- DFT helpers
def _dft_parts(n):
    """Real / imag parts (float64) of scipy.linalg.dft(n): W[j,k]=exp(-2i*pi*j*k/n)."""
    idx = np.arange(n)
    phase = -2.0 * np.pi * np.outer(idx, idx) / n
    return np.cos(phase), np.sin(phase)


def _batch_tile(batch, max_tile):
    """Batch tile that divides `batch`. Multiples of 8 keep the (8,128) block
    rule satisfied when the batch dim is the second-to-last block dim."""
    if batch <= max_tile:
        return batch
    for bt in range(max_tile, 7, -8):
        if batch % bt == 0:
            return bt
    return batch


# --------------------------------------------------------- kernel 1: Kronecker
def _kron_kernel(x_ref, w_ref, o_ref):
    # x_ref: (bt, S*H)   w_ref: (S*H, S*H)   o_ref: (bt, S*H) f32
    o_ref[...] = jnp.dot(x_ref[...], w_ref[...],
                         preferred_element_type=jnp.float32).astype(o_ref.dtype)


def _fourier_mm_kron(x_flat, w, block_b):
    batch, sh = x_flat.shape
    grid = (pl.cdiv(batch, block_b),)
    bytes_accessed = (x_flat.size * x_flat.dtype.itemsize
                      + w.size * w.dtype.itemsize
                      + batch * sh * 4)
    return pl.pallas_call(
        _kron_kernel,
        out_shape=jax.ShapeDtypeStruct((batch, sh), jnp.float32),
        grid_spec=pltpu.PrefetchScalarGridSpec(
            num_scalar_prefetch=0,
            grid=grid,
            in_specs=[
                pl.BlockSpec((block_b, sh), lambda i: (i, 0)),  # X (batch folded into M)
                pl.BlockSpec((sh, sh), lambda i: (0, 0)),       # W (grid-constant)
            ],
            out_specs=pl.BlockSpec((block_b, sh), lambda i: (i, 0)),
        ),
        compiler_params=pltpu.CompilerParams(dimension_semantics=("parallel",)),
        cost_estimate=pl.CostEstimate(flops=2 * batch * sh * sh,
                                      transcendentals=0,
                                      bytes_accessed=bytes_accessed),
    )(x_flat, w)


# --------------------------------------------------- kernel 2: fused two-stage
def _fused_kernel(x_ref, wh_ref, ws_ref, o_ref):
    # x_ref : (bt, S, H)          compute dtype
    # wh_ref: (H, 2H) = [Ah | Bh]
    # ws_ref: (S, 2S) = [As | -Bs]
    # o_ref : (bt, S, H) f32
    bt, s, h = x_ref.shape
    cdt = x_ref.dtype
    # Hidden side: fold batch into M and fuse the Re/Im matmuls into one pass.
    x2d = x_ref[...].reshape(bt * s, h)
    y = jnp.dot(x2d, wh_ref[...], preferred_element_type=jnp.float32)
    y = y.reshape(bt, s, 2 * h).astype(cdt)
    ws = ws_ref[...]
    # Seq side: one fused MXU pass per batch element (bt is kept small, static unroll).
    # TODO(synk): for very large seq_len, stream (tile_S, S) slices of the seq-DFT
    # via an extra grid axis so As/Bs never need to be fully VMEM-resident (v7x 64 MiB).
    for b in range(bt):
        stacked = jnp.concatenate([y[b, :, :h], y[b, :, h:]], axis=0)  # (2S, H)
        o_ref[b] = jnp.dot(ws, stacked,
                           preferred_element_type=jnp.float32).astype(o_ref.dtype)


def _fourier_mm_fused(x, wh, ws, block_b):
    batch, s, h = x.shape
    grid = (pl.cdiv(batch, block_b),)
    bytes_accessed = (x.size * x.dtype.itemsize
                      + wh.size * wh.dtype.itemsize
                      + ws.size * ws.dtype.itemsize
                      + batch * s * h * 4)
    return pl.pallas_call(
        _fused_kernel,
        out_shape=jax.ShapeDtypeStruct((batch, s, h), jnp.float32),
        grid_spec=pltpu.PrefetchScalarGridSpec(
            num_scalar_prefetch=0,
            grid=grid,
            in_specs=[
                pl.BlockSpec((block_b, s, h), lambda i: (i, 0, 0)),  # X
                pl.BlockSpec((h, 2 * h), lambda i: (0, 0)),          # [Ah | Bh]
                pl.BlockSpec((s, 2 * s), lambda i: (0, 0)),          # [As | -Bs]
            ],
            out_specs=pl.BlockSpec((block_b, s, h), lambda i: (i, 0, 0)),
        ),
        compiler_params=pltpu.CompilerParams(dimension_semantics=("parallel",)),
        cost_estimate=pl.CostEstimate(flops=4 * batch * s * h * (s + h),
                                      transcendentals=0,
                                      bytes_accessed=bytes_accessed),
    )(x, wh, ws)


# ------------------------------------------------------------------ public API
def make_fourier_mm(max_position_embeddings, hidden_size,
                    compute_dtype=jnp.bfloat16, use_kron=None,
                    kron_max_elems=2048):
    """Returns apply(hidden_states[B,S,H]) -> float32[B,S,H] == Re(Fs @ X @ Fh)."""
    s, h = max_position_embeddings, hidden_size
    a_s, b_s = _dft_parts(s)
    a_h, b_h = _dft_parts(h)
    sh = s * h
    if use_kron is None:
        use_kron = sh <= kron_max_elems

    if use_kron:
        # W[(i*H+j),(n*H+k)] = As[n,i]*Ah[j,k] - Bs[n,i]*Bh[j,k]
        w = jnp.asarray(np.kron(a_s.T, a_h) - np.kron(b_s.T, b_h),
                        dtype=compute_dtype)

        def apply(hidden_states):
            batch = hidden_states.shape[0]
            x_flat = hidden_states.reshape(batch, sh).astype(compute_dtype)
            bt = _batch_tile(batch, 256)
            out = _fourier_mm_kron(x_flat, w, bt)
            return out.reshape(batch, s, h)
        return apply

    wh = jnp.asarray(np.concatenate([a_h, b_h], axis=1), dtype=compute_dtype)
    ws = jnp.asarray(np.concatenate([a_s, -b_s], axis=1), dtype=compute_dtype)

    def apply(hidden_states):
        batch = hidden_states.shape[0]
        xc = hidden_states.astype(compute_dtype)
        bt = _batch_tile(batch, 8)   # seq-side dots are unrolled per batch element
        return _fourier_mm_fused(xc, wh, ws, bt)
    return apply


if __name__ == "__main__":
    # config: max_position_embeddings (seq) = 8, hidden_size = 32, batch = 2
    B, S, H = 2, 8, 32
    key = jax.random.PRNGKey(0)
    hidden_states = jax.random.normal(key, (B, S, H), dtype=jnp.float32)

    # Reference mirroring the PyTorch module exactly (complex128, real part).
    a_s, b_s = _dft_parts(S)
    a_h, b_h = _dft_parts(H)
    f_s = a_s + 1j * b_s
    f_h = a_h + 1j * b_h
    x128 = np.asarray(hidden_states, dtype=np.float64).astype(np.complex128)
    ref = np.real(np.einsum('bij,jk,ni->bnk', x128, f_h, f_s)).astype(np.float64)

    #            name          kron   compute dtype   rel_fro   max_abs
    configs = [("kron/bf16",   True,  jnp.bfloat16,   2e-2,     0.5),
               ("kron/f32",    True,  jnp.float32,    1e-4,     1e-3),
               ("fused/bf16",  False, jnp.bfloat16,   2e-2,     0.6),
               ("fused/f32",   False, jnp.float32,    1e-4,     1e-3)]
    for name, use_kron, cdt, rel_tol, abs_tol in configs:
        layer = make_fourier_mm(S, H, compute_dtype=cdt, use_kron=use_kron)
        out = jax.block_until_ready(layer(hidden_states))
        assert out.shape == (B, S, H) and out.dtype == jnp.float32, name
        err = np.asarray(out, dtype=np.float64) - ref
        rel = np.linalg.norm(err) / np.linalg.norm(ref)
        mx = np.max(np.abs(err))
        assert rel < rel_tol and mx < abs_tol, (name, float(rel), float(mx))

    print("KERNEL_OK")
</pallas_src>

<mosaic_0001>
module attributes {stable_mosaic.version = 11 : i64} {
  func.func @_kron_kernel(%arg0: i32, %arg1: memref<2x256xbf16, #tpu.memory_space<vmem>>, %arg2: memref<256x256xbf16, #tpu.memory_space<vmem>>, %arg3: memref<2x256xf32, #tpu.memory_space<vmem>>) attributes {dimension_semantics = [#tpu.dimension_semantics<parallel>], iteration_bounds = array<i64: 1>, scalar_prefetch = 0 : i64, scratch_operands = 0 : i64, tpu.core_type = #tpu.core_type<tc>, window_params = [{transform_indices = @transform_0, window_bounds = array<i64: 2, 256>}, {pipeline_mode = #tpu.pipeline_mode<synchronous>, transform_indices = @transform_1, window_bounds = array<i64: 256, 256>}, {transform_indices = @transform_2, window_bounds = array<i64: 2, 256>}]} {
    %c0 = arith.constant 0 : index
    %c0_0 = arith.constant 0 : index
    %0 = vector.load %arg1[%c0, %c0_0] : memref<2x256xbf16, #tpu.memory_space<vmem>>, vector<2x256xbf16>
    %c0_1 = arith.constant 0 : index
    %c0_2 = arith.constant 0 : index
    %1 = vector.load %arg2[%c0_1, %c0_2] : memref<256x256xbf16, #tpu.memory_space<vmem>>, vector<256x256xbf16>
    %cst = arith.constant dense<0.000000e+00> : vector<2x256xf32>
    %2 = tpu.matmul %0, %1, %cst {dimension_numbers = #tpu.dot_dimension_numbers<[1], [0], [0], [1], [0, 0, 1, 1], [], []>} : vector<2x256xbf16>, vector<256x256xbf16>, vector<2x256xf32> -> vector<2x256xf32>
    %c0_3 = arith.constant 0 : index
    %c0_4 = arith.constant 0 : index
    %3 = vector.load %arg3[%c0_3, %c0_4] : memref<2x256xf32, #tpu.memory_space<vmem>>, vector<2x256xf32>
    tpu.vector_store %arg3[%c0_3, %c0_4], %2 {strides = array<i32>} : memref<2x256xf32, #tpu.memory_space<vmem>>, vector<2x256xf32>,
    return
  }
  func.func @transform_0(%arg0: i32) -> (i32, i32) {
    %c0_i32 = arith.constant 0 : i32
    %c0_i32_0 = arith.constant 0 : i32
    return %arg0, %c0_i32 : i32, i32
  }
  func.func @transform_1(%arg0: i32) -> (i32, i32) {
    %c0_i32 = arith.constant 0 : i32
    %c0_i32_0 = arith.constant 0 : i32
    %c0_i32_1 = arith.constant 0 : i32
    return %c0_i32, %c0_i32_0 : i32, i32
  }
  func.func @transform_2(%arg0: i32) -> (i32, i32) {
    %c0_i32 = arith.constant 0 : i32
    %c0_i32_0 = arith.constant 0 : i32
    return %arg0, %c0_i32 : i32, i32
  }
}

</mosaic_0001>

<llo_original>
// kernel: tpu_custom_call.1
$region0: #{tpu_custom_call.1}
  #allocation0 [shape = 'u32[]', space=smem, size = 0x4, offset = 0x4, fixed_abs, tag = 'smem constant byte address 0x4 - core index']
  #allocation1 [shape = 'u32[144,128]{1,0:T(1,128)}', space=vmem, size = 0x12000, scoped, tag = 'internal scratch']
  %s0 = inlined_call_operand.hbm [shape: bf16[2,256], index: 0, kind: input, shape index: {}]
  %s1 = inlined_call_operand.hbm [shape: bf16[256,256], index: 1, kind: input, shape index: {}]
  %s2 = inlined_call_operand.hbm [shape: f32[2,256], index: 2, kind: output, shape index: {}]
  %s3 = sld [smem:[#allocation0]]
  $region26: #{tpu_custom_call.1} parent=0
    _
  %s5 = ssub.s32 1, %s3
  %s6 = scalar_select 0, %s5, %s3
  $region1: #{tpu_custom_call.1} parent=0
    #allocation2 [shape = 'u8[1024]{0}', space=vmem, size = 0x400, scoped, tag = 'input window, operand 0, single buffered']
    #allocation3 [shape = 's32[1]{0}', space=sflag, size = 0x4, scoped, tag = 'scoped memory for tpu_custom_call.1']
    #allocation4 [shape = 's32[1]{0}', space=sflag, size = 0x4, scoped, tag = 'scoped memory for tpu_custom_call.1']
    #allocation5 [shape = 'u8[131072]{0}', space=vmem, size = 0x20000, scoped, tag = 'input window, operand 1, single buffered']
    #allocation6 [shape = 's32[1]{0}', space=sflag, size = 0x4, scoped, tag = 'scoped memory for tpu_custom_call.1']
    #allocation7 [shape = 'u8[2048]{0}', space=vmem, size = 0x800, scoped, tag = 'output window, operand 0, single buffered']
    %7 = vsyncpa [#allocation3], 0
    %8 = vsyncpa [#allocation6], 0
    %9 = vsyncpa [#allocation4], 0
    // Predicated region
    $region2: #{tpu_custom_call.1} parent=1 // pred_check
      _
    $region3: #{tpu_custom_call.1} parent=1 // pred_check_branch
      %11 = sbr.rel (0) target = $region5
    $region4: #{tpu_custom_call.1} parent=1 // pred_region
      %s13 = ssub.s32 32, 32
      %14 = vsyncadd [#allocation3], %s13
      %s16 = sshll.u32 [#allocation2], 4
      %s17 = int_to_ptr.vmem [resolvable:$true] %s16
      %19 = dma.hbm_to_vmem [thread:$0]  %s0, 32, %s17, [#allocation3]
    $region5: #{tpu_custom_call.1} parent=1 // pred_fallthru
      _
    // Predicated region
    $region6: #{tpu_custom_call.1} parent=1 // pred_check
      _
    $region7: #{tpu_custom_call.1} parent=1 // pred_check_branch
      %21 = sbr.rel (0) target = $region9
    $region8: #{tpu_custom_call.1} parent=1 // pred_region
      %s23 = ssub.s32 4096, 4096
      %24 = vsyncadd [#allocation6], %s23
      %s25 = sshll.u32 [#allocation5], 4
      %s26 = int_to_ptr.vmem [resolvable:$true] %s25
      %31 = dma.hbm_to_vmem [thread:$0]  %s1, 4096, %s26, [#allocation6], 128, 128, 8
    $region9: #{tpu_custom_call.1} parent=1 // pred_fallthru
      _
    // Predicated region
    $region10: #{tpu_custom_call.1} parent=1 // pred_check
      _
    $region11: #{tpu_custom_call.1} parent=1 // pred_check_branch
      %33 = sbr.rel (0) target = $region13
    $region12: #{tpu_custom_call.1} parent=1 // pred_region
      %34 = dma.done [#allocation3], 32
    $region13: #{tpu_custom_call.1} parent=1 // pred_fallthru
      _
    // Predicated region
    $region14: #{tpu_custom_call.1} parent=1 // pred_check
      _
    $region15: #{tpu_custom_call.1} parent=1 // pred_check_branch
      %36 = sbr.rel (0) target = $region17
    $region16: #{tpu_custom_call.1} parent=1 // pred_region
      %37 = dma.done [#allocation6], 4096
    $region17: #{tpu_custom_call.1} parent=1 // pred_fallthru
      _
    %v38 = vld [vmem:[#allocation2] sm:$0x3]
    %v39 = vld [vmem:[#allocation5] sm:$0xff]
    %v40 = vld [vmem:[#allocation5 + $0x8] sm:$0xff]
    %v41 = vld [vmem:[#allocation5 + $0x10] sm:$0xff]
    %v42 = vld [vmem:[#allocation5 + $0x18] sm:$0xff]
    %v43 = vld [vmem:[#allocation5 + $0x20] sm:$0xff]
    %v44 = vld [vmem:[#allocation5 + $0x28] sm:$0xff]
    %v45 = vld [vmem:[#allocation5 + $0x30] sm:$0xff]
    %v46 = vld [vmem:[#allocation5 + $0x38] sm:$0xff]
    %v47 = vld [vmem:[#allocation5 + $0x40] sm:$0xff]
    %v48 = vld [vmem:[#allocation5 + $0x48] sm:$0xff]
    %v49 = vld [vmem:[#allocation5 + $0x50] sm:$0xff]
    %v50 = vld [vmem:[#allocation5 + $0x58] sm:$0xff]
    %v51 = vld [vmem:[#allocation5 + $0x60] sm:$0xff]
    %v52 = vld [vmem:[#allocation5 + $0x68] sm:$0xff]
    %v53 = vld [vmem:[#allocation5 + $0x70] sm:$0xff]
    %v54 = vld [vmem:[#allocation5 + $0x78] sm:$0xff]
    %v55 = vld [vmem:[#allocation5 + $0x80] sm:$0xff]
    %v56 = vld [vmem:[#allocation5 + $0x88] sm:$0xff]
    %v57 = vld [vmem:[#allocation5 + $0x90] sm:$0xff]
    %v58 = vld [vmem:[#allocation5 + $0x98] sm:$0xff]
    %v59 = vld [vmem:[#allocation5 + $0xa0] sm:$0xff]
    %v60 = vld [vmem:[#allocation5 + $0xa8] sm:$0xff]
    %v61 = vld [vmem:[#allocation5 + $0xb0] sm:$0xff]
    %v62 = vld [vmem:[#allocation5 + $0xb8] sm:$0xff]
    %v63 = vld [vmem:[#allocation5 + $0xc0] sm:$0xff]
    %v64 = vld [vmem:[#allocation5 + $0xc8] sm:$0xff]
    %v65 = vld [vmem:[#allocation5 + $0xd0] sm:$0xff]
    %v66 = vld [vmem:[#allocation5 + $0xd8] sm:$0xff]
    %v67 = vld [vmem:[#allocation5 + $0xe0] sm:$0xff]
    %v68 = vld [vmem:[#allocation5 + $0xe8] sm:$0xff]
    %v69 = vld [vmem:[#allocation5 + $0xf0] sm:$0xff]
    %v70 = vld [vmem:[#allocation5 + $0xf8] sm:$0xff]
    %v73 = vunpack.c.l.s4 1966171168
    %v74 = vunpack.c.0.s8 %v73
    %v75 = vlaneseq
    %v76 = vshrl.u32 %v75, 7
    %v77 = vsub.s32 %v74, %v76
    %v78 = vrot.slane %v38, %v77
    %v79 = vcombine.high %v78, %v78
    %v81 = vunpack.c.l.s4 1966171168
    %v82 = vunpack.c.0.s8 %v81
    %v83 = vlaneseq
    %v84 = vshrl.u32 %v83, 7
    %v85 = vsub.s32 %v82, %v84
    %v86 = vrot.slane %v78, %v85
    %v88 = vunpack.c.l.s4 1966171168
    %v89 = vunpack.c.0.s8 %v88
    %v90 = vlaneseq
    %v91 = vshrl.u32 %v90, 7
    %v92 = vsub.s32 %v89, %v91
    %v93 = vrot.slane %v79, %v92
    %v128 = vunpack.c.l.b16 %v39
    %v129 = vunpack.c.h.b16 %v39
    %v130 = vunpack.c.l.b16 %v40
    %v131 = vunpack.c.h.b16 %v40
    %v132 = vunpack.c.l.b16 %v41
    %v133 = vunpack.c.h.b16 %v41
    %v134 = vunpack.c.l.b16 %v42
    %v135 = vunpack.c.h.b16 %v42
    %v136 = vunpack.c.l.b16 %v43
    %v137 = vunpack.c.h.b16 %v43
    %v138 = vunpack.c.l.b16 %v44
    %v139 = vunpack.c.h.b16 %v44
    %v140 = vunpack.c.l.b16 %v45
    %v141 = vunpack.c.h.b16 %v45
    %v142 = vunpack.c.l.b16 %v46
    %v143 = vunpack.c.h.b16 %v46
    %v144 = vunpack.c.l.b16 %v47
    %v145 = vunpack.c.h.b16 %v47
    %v146 = vunpack.c.l.b16 %v48
    %v147 = vunpack.c.h.b16 %v48
    %v148 = vunpack.c.l.b16 %v49
    %v149 = vunpack.c.h.b16 %v49
    %v150 = vunpack.c.l.b16 %v50
    %v151 = vunpack.c.h.b16 %v50
    %v152 = vunpack.c.l.b16 %v51
    %v153 = vunpack.c.h.b16 %v51
    %v154 = vunpack.c.l.b16 %v52
    %v155 = vunpack.c.h.b16 %v52
    %v156 = vunpack.c.l.b16 %v53
    %v157 = vunpack.c.h.b16 %v53
    %v158 = vunpack.c.l.b16 %v54
    %v159 = vunpack.c.h.b16 %v54
    %v160 = vunpack.c.l.b16 %v55
    %v161 = vunpack.c.h.b16 %v55
    %v162 = vunpack.c.l.b16 %v56
    %v163 = vunpack.c.h.b16 %v56
    %v164 = vunpack.c.l.b16 %v57
    %v165 = vunpack.c.h.b16 %v57
    %v166 = vunpack.c.l.b16 %v58
    %v167 = vunpack.c.h.b16 %v58
    %v168 = vunpack.c.l.b16 %v59
    %v169 = vunpack.c.h.b16 %v59
    %v170 = vunpack.c.l.b16 %v60
    %v171 = vunpack.c.h.b16 %v60
    %v172 = vunpack.c.l.b16 %v61
    %v173 = vunpack.c.h.b16 %v61
    %v174 = vunpack.c.l.b16 %v62
    %v175 = vunpack.c.h.b16 %v62
    %v176 = vunpack.c.l.b16 %v63
    %v177 = vunpack.c.h.b16 %v63
    %v178 = vunpack.c.l.b16 %v64
    %v179 = vunpack.c.h.b16 %v64
    %v180 = vunpack.c.l.b16 %v65
    %v181 = vunpack.c.h.b16 %v65
    %v182 = vunpack.c.l.b16 %v66
    %v183 = vunpack.c.h.b16 %v66
    %v184 = vunpack.c.l.b16 %v67
    %v185 = vunpack.c.h.b16 %v67
    %v186 = vunpack.c.l.b16 %v68
    %v187 = vunpack.c.h.b16 %v68
    %v188 = vunpack.c.l.b16 %v69
    %v189 = vunpack.c.h.b16 %v69
    %v190 = vunpack.c.l.b16 %v70
    %v191 = vunpack.c.h.b16 %v70
    %v192 = vpack.c.b16 %v130, %v128
    %v193 = vpack.c.b16 %v131, %v129
    %v194 = vpack.c.b16 %v134, %v132
    %v195 = vpack.c.b16 %v135, %v133
    %v196 = vpack.c.b16 %v138, %v136
    %v197 = vpack.c.b16 %v139, %v137
    %v198 = vpack.c.b16 %v142, %v140
    %v199 = vpack.c.b16 %v143, %v141
    %v200 = vpack.c.b16 %v146, %v144
    %v201 = vpack.c.b16 %v147, %v145
    %v202 = vpack.c.b16 %v150, %v148
    %v203 = vpack.c.b16 %v151, %v149
    %v204 = vpack.c.b16 %v154, %v152
    %v205 = vpack.c.b16 %v155, %v153
    %v206 = vpack.c.b16 %v158, %v156
    %v207 = vpack.c.b16 %v159, %v157
    %v208 = vpack.c.b16 %v162, %v160
    %v209 = vpack.c.b16 %v163, %v161
    %v210 = vpack.c.b16 %v166, %v164
    %v211 = vpack.c.b16 %v167, %v165
    %v212 = vpack.c.b16 %v170, %v168
    %v213 = vpack.c.b16 %v171, %v169
    %v214 = vpack.c.b16 %v174, %v172
    %v215 = vpack.c.b16 %v175, %v173
    %v216 = vpack.c.b16 %v178, %v176
    %v217 = vpack.c.b16 %v179, %v177
    %v218 = vpack.c.b16 %v182, %v180
    %v219 = vpack.c.b16 %v183, %v181
    %v220 = vpack.c.b16 %v186, %v184
    %v221 = vpack.c.b16 %v187, %v185
    %v222 = vpack.c.b16 %v190, %v188
    %v223 = vpack.c.b16 %v191, %v189
    %256 = vmatprep.subr.bf16.mxu0 %v207
    %257 = vmatpush1.bf16.msra.mxu0 %v206
    %258 = vmatprep.subr.bf16.mxu0 %v205
    %259 = vmatpush1.bf16.msra.mxu0 %v204
    %260 = vmatprep.subr.bf16.mxu0 %v203
    %261 = vmatpush1.bf16.msra.mxu0 %v202
    %262 = vmatprep.subr.bf16.mxu0 %v201
    %263 = vmatpush1.bf16.msra.mxu0 %v200
    %264 = vmatprep.subr.bf16.mxu0 %v199
    %265 = vmatpush1.bf16.msra.mxu0 %v198
    %266 = vmatprep.subr.bf16.mxu0 %v197
    %267 = vmatpush1.bf16.msra.mxu0 %v196
    %268 = vmatprep.subr.bf16.mxu0 %v195
    %269 = vmatpush1.bf16.msra.mxu0 %v194
    %270 = vmatprep.subr.bf16.mxu0 %v193
    %271 = vmatpush1.bf16.msra.mxu0 %v192
    %272 = vmatprep.subr.bf16.mxu0 %v223
    %273 = vmatpush2.bf16.msra.mxu0 %v222
    %274 = vmatprep.subr.bf16.mxu0 %v221
    %275 = vmatpush2.bf16.msra.mxu0 %v220
    %276 = vmatprep.subr.bf16.mxu0 %v219
    %277 = vmatpush2.bf16.msra.mxu0 %v218
    %278 = vmatprep.subr.bf16.mxu0 %v217
    %279 = vmatpush2.bf16.msra.mxu0 %v216
    %280 = vmatprep.subr.bf16.mxu0 %v215
    %281 = vmatpush2.bf16.msra.mxu0 %v214
    %282 = vmatprep.subr.bf16.mxu0 %v213
    %283 = vmatpush2.bf16.msra.mxu0 %v212
    %284 = vmatprep.subr.bf16.mxu0 %v211
    %285 = vmatpush2.bf16.msra.mxu0 %v210
    %286 = vmatprep.subr.bf16.mxu0 %v209
    %287 = vmatpush2.bf16.msra.mxu0 %v208
    %288 = vmatprep.mubr.bf16.mxu0 %v93
    %289 = vmatmul.mubr.bf16.gmra.mxu0 %v86
    %v290 = vpop.f32.mrf.mxu0
    %v291 = vadd.f32 0.0, %v290
    %v292 = vpop.f32.mrf.mxu0
    %v293 = vadd.f32 0.0, %v292
    %v294 = vpop.f32.mrf.mxu0
    %v295 = vpop.f32.mrf.mxu0
    %296 = vdwg.mxu0
    %v299 = vcombine.low %v291, %v293
    %v301 = vunpack.c.l.s4 1983009808
    %v302 = vunpack.c.0.s8 %v301
    %v303 = vlaneseq
    %v304 = vshrl.u32 %v303, 7
    %v305 = vsub.s32 %v302, %v304
    %v306 = vrot.slane %v299, %v305
    %308 = vst [vmem:[#allocation7] sm:$0xf] %v306
    // Predicated region
    $region18: #{tpu_custom_call.1} parent=1 // pred_check
      _
    $region19: #{tpu_custom_call.1} parent=1 // pred_check_branch
      %310 = sbr.rel (0) target = $region21
    $region20: #{tpu_custom_call.1} parent=1 // pred_region
      %s312 = ssub.s32 64, 64
      %313 = vsyncadd [#allocation4], %s312
      %s315 = sshll.u32 [#allocation7], 4
      %s316 = int_to_ptr.vmem [resolvable:$true] %s315
      %318 = dma.vmem_to_hbm [thread:$0]  %s316, 64, %s2, [#allocation4]
    $region21: #{tpu_custom_call.1} parent=1 // pred_fallthru
      _
    // Predicated region
    $region22: #{tpu_custom_call.1} parent=1 // pred_check
      _
    $region23: #{tpu_custom_call.1} parent=1 // pred_check_branch
      %320 = sbr.rel (0) target = $region25
    $region24: #{tpu_custom_call.1} parent=1 // pred_region
      %321 = dma.done [#allocation4], 64
    $region25: #{tpu_custom_call.1} parent=1 // pred_fallthru
      _
    %322 = vsyncpa [#allocation3], 1
    %323 = vsyncpa [#allocation6], 1
    %324 = vsyncpa [#allocation4], 1

</llo_original>
